<compile_context>
chip_gen: v7x
topology: tpu7x:2x2x1
jax: 0.10.0
libtpu: 0.0.40
codegen_flags: <defaults>
</compile_context>

<pallas_src>
import jax
import jax.numpy as jnp
from jax.experimental import pallas as pl
from jax.experimental.pallas import tpu as pltpu


def _conv_relu_kernel_factory(KH, KW, Cin_p, Wp, S):
    """Builds the kernel for one padded image per grid step.

    x_ref: (1, Cin_p, L)        bf16, SAME-padded image, spatial flattened row-major (width Wp)
    w_ref: (Cout, KH*KW*Cin_p)  bf16, taps stacked in (kh, kw, cin) order
    o_ref: (1, Cout, S)         f32,  S = H*Wp (junk right-border columns trimmed by the wrapper)
    """

    def kernel(x_ref, w_ref, o_ref):
        xv = x_ref[...][0]                      # (Cin_p, L) bf16

        # im2col without reshapes: tap (kh, kw) for output flat position m = i*Wp + j is just
        # xv[:, m + kh*Wp + kw]  ->  a constant lane-offset slice (lane shift on the XLU slot).
        taps = []
        for kh in range(KH):
            for kw in range(KW):
                d = kh * Wp + kw
                taps.append(xv[:, d:d + S])     # (Cin_p, S)
        patch = jnp.concatenate(taps, axis=0)   # (KH*KW*Cin_p, S), tile-aligned sublane stack

        # Single fused MXU matmul, f32 accumulation: (Cout, K) @ (K, S) -> (Cout, S)
        acc = jax.lax.dot_general(
            w_ref[...], patch,
            dimension_numbers=(((1,), (0,)), ((), ())),
            preferred_element_type=jnp.float32,
        )
        o_ref[...] = jnp.maximum(acc, 0.0)[None].astype(o_ref.dtype)

    return kernel


def single_scale_conv_block(x_nchw, weight_oihw, kernel_size=3):
    """SingleScaleConvBlock.forward: ReLU(Conv2d(x)), padding=k//2, bias=False.

    x_nchw:      (N, Cin, H, W)  float32
    weight_oihw: (Cout, Cin, KH, KW) float32
    returns      (N, Cout, H, W) float32
    """
    N, Cin, H, W = x_nchw.shape
    Cout = weight_oihw.shape[0]
    KH = KW = kernel_size
    pad = kernel_size // 2
    Wp = W + 2 * pad

    # Channels padded to the bf16 sublane tile so the in-kernel tap stack is tile-aligned.
    CIN_TILE = 16
    Cin_p = ((Cin + CIN_TILE - 1) // CIN_TILE) * CIN_TILE

    S = H * Wp                           # flat output length per image (incl. junk border cols)
    # `pad` rows on top, `pad`+1 rows at the bottom: the extra guard row keeps the farthest tap's
    # flat slice (offset (KH-1)*Wp + KW-1, length S) in bounds.
    Hp_guard = H + 2 * pad + 1
    L = Hp_guard * Wp

    # --- wrapper glue (layout only): bf16 cast + channel/spatial zero-pad + spatial flatten ---
    xb = x_nchw.astype(jnp.bfloat16)
    xb = jnp.pad(xb, ((0, 0), (0, Cin_p - Cin), (pad, pad + 1), (pad, pad)))
    xf = xb.reshape(N, Cin_p, L)

    # weight: OIHW -> (Cout, KH, KW, Cin) -> zero-pad Cin -> (Cout, KH*KW*Cin_p), bf16
    wb = jnp.transpose(weight_oihw.astype(jnp.bfloat16), (0, 2, 3, 1))
    wb = jnp.pad(wb, ((0, 0), (0, 0), (0, 0), (0, Cin_p - Cin)))
    w2d = wb.reshape(Cout, KH * KW * Cin_p)

    kernel = _conv_relu_kernel_factory(KH, KW, Cin_p, Wp, S)

    # One image per grid step. For production DnCNN sizes on v7x (64 MiB VMEM, 2 TCs), tile the
    # flat spatial axis instead (halo = (KH-1)*Wp + KW-1 lanes via manual DMA) to get more
    # parallel grid points; the whole test image fits VMEM trivially, so it is omitted here.
    out_flat = pl.pallas_call(
        kernel,
        out_shape=jax.ShapeDtypeStruct((N, Cout, S), jnp.float32),
        grid_spec=pltpu.PrefetchScalarGridSpec(
            num_scalar_prefetch=0,
            grid=(N,),
            in_specs=[
                pl.BlockSpec((1, Cin_p, L), lambda n: (n, 0, 0)),
                pl.BlockSpec((Cout, KH * KW * Cin_p), lambda n: (0, 0)),
            ],
            out_specs=pl.BlockSpec((1, Cout, S), lambda n: (n, 0, 0)),
        ),
        compiler_params=pltpu.CompilerParams(
            dimension_semantics=("parallel",),
            vmem_limit_bytes=48 * 1024 * 1024,
        ),
    )(xf, w2d)

    # (N, Cout, H*Wp) -> (N, Cout, H, Wp) -> drop the 2*pad junk right-border columns -> NCHW
    return out_flat.reshape(N, Cout, H, Wp)[:, :, :, :W]


if __name__ == "__main__":
    key = jax.random.PRNGKey(0)
    kx, kw = jax.random.split(key)

    N, Cin, H, W = 2, 4, 16, 16
    Cout, K = 8, 3

    x = jax.random.normal(kx, (N, Cin, H, W), dtype=jnp.float32)
    # PyTorch Conv2d default init: U(-b, b), b = 1/sqrt(fan_in).
    fan_in = Cin * K * K
    bound = 1.0 / (fan_in ** 0.5)
    weight = jax.random.uniform(kw, (Cout, Cin, K, K), dtype=jnp.float32,
                                minval=-bound, maxval=bound)

    out = single_scale_conv_block(x, weight, kernel_size=K)
    out = jax.block_until_ready(out)
    assert out.shape == (N, Cout, H, W)

    # Reference: XLA conv + ReLU on the same bf16-rounded operands (the kernel computes
    # bf16 x bf16 -> f32, so compare against exact f32 math on bf16-rounded inputs).
    xq = x.astype(jnp.bfloat16).astype(jnp.float32)
    wq = weight.astype(jnp.bfloat16).astype(jnp.float32)
    ref = jax.lax.conv_general_dilated(
        xq, wq, window_strides=(1, 1), padding="SAME",
        dimension_numbers=("NCHW", "OIHW", "NCHW"),
        precision=jax.lax.Precision.HIGHEST)
    ref = jnp.maximum(ref, 0.0)

    err = float(jnp.max(jnp.abs(out - ref)))
    assert jnp.allclose(out, ref, atol=5e-3, rtol=5e-3), f"max abs err {err}"

    print("KERNEL_OK")
</pallas_src>

<mosaic_0001>
module attributes {stable_mosaic.version = 11 : i64} {
  func.func @kernel(%arg0: i32, %arg1: memref<1x16x342xbf16, #tpu.memory_space<vmem>>, %arg2: memref<8x144xbf16, #tpu.memory_space<vmem>>, %arg3: memref<1x8x288xf32, #tpu.memory_space<vmem>>) attributes {dimension_semantics = [#tpu.dimension_semantics<parallel>], iteration_bounds = array<i64: 2>, scalar_prefetch = 0 : i64, scratch_operands = 0 : i64, tpu.core_type = #tpu.core_type<tc>, window_params = [{transform_indices = @transform_0, window_bounds = array<i64: 1, 16, 342>}, {pipeline_mode = #tpu.pipeline_mode<synchronous>, transform_indices = @transform_1, window_bounds = array<i64: 8, 144>}, {transform_indices = @transform_2, window_bounds = array<i64: 1, 8, 288>}]} {
    %c0 = arith.constant 0 : index
    %c0_0 = arith.constant 0 : index
    %c0_1 = arith.constant 0 : index
    %0 = vector.load %arg1[%c0, %c0_0, %c0_1] : memref<1x16x342xbf16, #tpu.memory_space<vmem>>, vector<1x16x342xbf16>
    %1 = vector.shape_cast %0 : vector<1x16x342xbf16> to vector<16x342xbf16>
    %2 = vector.extract_strided_slice %1 {offsets = [0, 0], sizes = [16, 288], strides = [1, 1]} : vector<16x342xbf16> to vector<16x288xbf16>
    %3 = vector.extract_strided_slice %1 {offsets = [0, 1], sizes = [16, 288], strides = [1, 1]} : vector<16x342xbf16> to vector<16x288xbf16>
    %4 = vector.extract_strided_slice %1 {offsets = [0, 2], sizes = [16, 288], strides = [1, 1]} : vector<16x342xbf16> to vector<16x288xbf16>
    %5 = vector.extract_strided_slice %1 {offsets = [0, 18], sizes = [16, 288], strides = [1, 1]} : vector<16x342xbf16> to vector<16x288xbf16>
    %6 = vector.extract_strided_slice %1 {offsets = [0, 19], sizes = [16, 288], strides = [1, 1]} : vector<16x342xbf16> to vector<16x288xbf16>
    %7 = vector.extract_strided_slice %1 {offsets = [0, 20], sizes = [16, 288], strides = [1, 1]} : vector<16x342xbf16> to vector<16x288xbf16>
    %8 = vector.extract_strided_slice %1 {offsets = [0, 36], sizes = [16, 288], strides = [1, 1]} : vector<16x342xbf16> to vector<16x288xbf16>
    %9 = vector.extract_strided_slice %1 {offsets = [0, 37], sizes = [16, 288], strides = [1, 1]} : vector<16x342xbf16> to vector<16x288xbf16>
    %10 = vector.extract_strided_slice %1 {offsets = [0, 38], sizes = [16, 288], strides = [1, 1]} : vector<16x342xbf16> to vector<16x288xbf16>
    %11 = tpu.concatenate %2, %3, %4, %5, %6, %7, %8, %9, %10 in 0 : vector<16x288xbf16>, vector<16x288xbf16>, vector<16x288xbf16>, vector<16x288xbf16>, vector<16x288xbf16>, vector<16x288xbf16>, vector<16x288xbf16>, vector<16x288xbf16>, vector<16x288xbf16> -> vector<144x288xbf16>
    %c0_2 = arith.constant 0 : index
    %c0_3 = arith.constant 0 : index
    %12 = vector.load %arg2[%c0_2, %c0_3] : memref<8x144xbf16, #tpu.memory_space<vmem>>, vector<8x144xbf16>
    %cst = arith.constant dense<0.000000e+00> : vector<8x288xf32>
    %13 = tpu.matmul %12, %11, %cst {dimension_numbers = #tpu.dot_dimension_numbers<[1], [0], [0], [1], [0, 0, 1, 1], [], []>} : vector<8x144xbf16>, vector<144x288xbf16>, vector<8x288xf32> -> vector<8x288xf32>
    %cst_4 = arith.constant 0.000000e+00 : f32
    %14 = vector.broadcast %cst_4 : f32 to vector<8x288xf32>
    %15 = arith.maximumf %13, %14 : vector<8x288xf32>
    %16 = vector.shape_cast %15 : vector<8x288xf32> to vector<1x8x288xf32>
    %c0_5 = arith.constant 0 : index
    %c0_6 = arith.constant 0 : index
    %c0_7 = arith.constant 0 : index
    %17 = vector.load %arg3[%c0_5, %c0_6, %c0_7] : memref<1x8x288xf32, #tpu.memory_space<vmem>>, vector<1x8x288xf32>
    tpu.vector_store %arg3[%c0_5, %c0_6, %c0_7], %16 {strides = array<i32>} : memref<1x8x288xf32, #tpu.memory_space<vmem>>, vector<1x8x288xf32>,
    return
  }
  func.func @transform_0(%arg0: i32) -> (i32, i32, i32) {
    %c0_i32 = arith.constant 0 : i32
    %c0_i32_0 = arith.constant 0 : i32
    %c0_i32_1 = arith.constant 0 : i32
    return %arg0, %c0_i32, %c0_i32_0 : i32, i32, i32
  }
  func.func @transform_1(%arg0: i32) -> (i32, i32) {
    %c0_i32 = arith.constant 0 : i32
    %c0_i32_0 = arith.constant 0 : i32
    %c0_i32_1 = arith.constant 0 : i32
    return %c0_i32, %c0_i32_0 : i32, i32
  }
  func.func @transform_2(%arg0: i32) -> (i32, i32, i32) {
    %c0_i32 = arith.constant 0 : i32
    %c0_i32_0 = arith.constant 0 : i32
    %c0_i32_1 = arith.constant 0 : i32
    return %arg0, %c0_i32, %c0_i32_0 : i32, i32, i32
  }
}

</mosaic_0001>

<llo_original>
// kernel: tpu_custom_call.1
$region0: #{tpu_custom_call.1}
  #allocation0 [shape = 'u32[]', space=smem, size = 0x4, offset = 0x4, fixed_abs, tag = 'smem constant byte address 0x4 - core index']
  #allocation1 [shape = 'u32[144,128]{1,0:T(1,128)}', space=vmem, size = 0x12000, scoped, tag = 'internal scratch']
  %s0 = inlined_call_operand.hbm [shape: bf16[2,16,342], index: 0, kind: input, shape index: {}]
  %s1 = inlined_call_operand.hbm [shape: bf16[8,144], index: 1, kind: input, shape index: {}]
  %s2 = inlined_call_operand.hbm [shape: f32[2,8,288], index: 2, kind: output, shape index: {}]
  %s3 = sld [smem:[#allocation0]]
  $region49: #{tpu_custom_call.1} parent=0
    _
  %s5 = ssub.s32 1, %s3
  %s6 = scalar_select 0, %s5, %s3
  $region1: #{tpu_custom_call.1} parent=0
    #allocation2 [shape = 'u8[24576]{0}', space=vmem, size = 0x6000, scoped, tag = 'input window, operand 0']
    #allocation3 [shape = 's32[2]{0}', space=sflag, size = 0x8, scoped, tag = 'scoped memory for tpu_custom_call.1']
    #allocation4 [shape = 's32[2]{0}', space=sflag, size = 0x8, scoped, tag = 'scoped memory for tpu_custom_call.1']
    #allocation5 [shape = 'u8[4096]{0}', space=vmem, size = 0x1000, scoped, tag = 'input window, operand 1, single buffered']
    #allocation6 [shape = 's32[1]{0}', space=sflag, size = 0x4, scoped, tag = 'scoped memory for tpu_custom_call.1']
    #allocation7 [shape = 'u8[24576]{0}', space=vmem, size = 0x6000, scoped, tag = 'output window, operand 0']
    %7 = vsyncpa [#allocation3], 0
    %s8 = scalar_lea.sflag [#allocation3], 1
    %9 = vsyncpa %s8, 0
    %10 = vsyncpa [#allocation6], 0
    %11 = vsyncpa [#allocation4], 0
    %s12 = scalar_lea.sflag [#allocation4], 1
    %13 = vsyncpa %s12, 0
    loop: start=0, step=1, limit=4
    $region2: #{tpu_custom_call.1} parent=1 // loop_pre_header
      _
    $region3: #{tpu_custom_call.1} parent=1 // loop_header
      %s15 = sphi 0, %s19
      %p16 = scmp.ge.s32.totalorder %s15, 4
      %s25 = sphi 0, %s27
      %s28 = sphi 0, %s25
      %s29 = sphi 0, %s28
      %s45 = sphi 0, %s29
      %s49 = sphi 0, %s49
      %s51 = sphi 0, %s49
      %s52 = sphi 0, %s51
      %s66 = sphi 0, %s52
      %s72 = sphi 0, %s74
      %s75 = sphi 0, %s72
      %s76 = sphi 0, %s75
      %s92 = sphi 0, %s76
    $region4: #{tpu_custom_call.1} parent=1 // loop_header_branch
      %18 = sbr.rel (%p16) target = $region8
    $region5: #{tpu_custom_call.1} parent=1 // loop_body
      %s20 = ssub.s32 %s15, 1
      %s21 = ssub.s32 %s15, 2
      %s22 = sadd.s32 %s15, 1
      %s23 = ssub.s32 %s15, %s22
      %p24 = scmp.eq.s32.totalorder %s23, 0
      %s26 = sadd.s32 %s25, 1
      %s27 = scalar_select %p24, %s25, %s26
      %p30 = pneg %p24
      %p31 = scmp.eq.s32.totalorder %s15, 1
      %p32 = por %p30, %p31
      %p33 = scmp.ne.s32.totalorder %s25, %s28
      %p34 = scmp.eq.s32.totalorder %s15, 0
      %p35 = por %p33, %p34
      %p36 = scmp.ne.s32.totalorder %s25, %s28
      %p37 = scmp.eq.s32.totalorder %s20, 1
      %p38 = por %p36, %p37
      %p39 = scmp.ne.s32.totalorder %s28, %s29
      %p40 = scmp.eq.s32.totalorder %s20, 0
      %p41 = por %p39, %p40
      %p42 = scmp.ne.s32.totalorder %s28, %s29
      %p43 = scmp.eq.s32.totalorder %s21, 1
      %p44 = por %p42, %p43
      %p46 = scmp.ne.s32.totalorder %s29, %s45
      %p47 = scmp.eq.s32.totalorder %s21, 0
      %p48 = por %p46, %p47
      %s50 = sadd.s32 %s49, 1
      %p53 = scmp.eq.s32.totalorder %s15, 1
      %p54 = scmp.ne.s32.totalorder %s49, %s51
      %p55 = scmp.eq.s32.totalorder %s15, 0
      %p56 = por %p54, %p55
      %p57 = scmp.ne.s32.totalorder %s49, %s51
      %p58 = scmp.eq.s32.totalorder %s20, 1
      %p59 = por %p57, %p58
      %p60 = scmp.ne.s32.totalorder %s51, %s52
      %p61 = scmp.eq.s32.totalorder %s20, 0
      %p62 = por %p60, %p61
      %p63 = scmp.ne.s32.totalorder %s51, %s52
      %p64 = scmp.eq.s32.totalorder %s21, 1
      %p65 = por %p63, %p64
      %p67 = scmp.ne.s32.totalorder %s52, %s66
      %p68 = scmp.eq.s32.totalorder %s21, 0
      %p69 = por %p67, %p68
      %s70 = ssub.s32 %s15, %s22
      %p71 = scmp.eq.s32.totalorder %s70, 0
      %s73 = sadd.s32 %s72, 1
      %s74 = scalar_select %p71, %s72, %s73
      %p77 = pneg %p71
      %p78 = scmp.eq.s32.totalorder %s15, 1
      %p79 = por %p77, %p78
      %p80 = scmp.ne.s32.totalorder %s72, %s75
      %p81 = scmp.eq.s32.totalorder %s15, 0
      %p82 = por %p80, %p81
      %p83 = scmp.ne.s32.totalorder %s72, %s75
      %p84 = scmp.eq.s32.totalorder %s20, 1
      %p85 = por %p83, %p84
      %p86 = scmp.ne.s32.totalorder %s75, %s76
      %p87 = scmp.eq.s32.totalorder %s20, 0
      %p88 = por %p86, %p87
      %p89 = scmp.ne.s32.totalorder %s75, %s76
      %p90 = scmp.eq.s32.totalorder %s21, 1
      %p91 = por %p89, %p90
      %p93 = scmp.ne.s32.totalorder %s76, %s92
      %p94 = scmp.eq.s32.totalorder %s21, 0
      %p95 = por %p93, %p94
      %p96 = scmp.le.s32.totalorder 1, %s15
      %p97 = scmp.lt.s32.totalorder %s15, 3
      %p98 = pnand %p96, %p97
      %p99 = pneg %p98
      // Predicated region
      $region9: #{tpu_custom_call.1} parent=5 // pred_check
        _
      $region10: #{tpu_custom_call.1} parent=5 // pred_check_branch
        %101 = sbr.rel (%p98) target = $region12
      $region11: #{tpu_custom_call.1} parent=5 // pred_region
        %s102 = ssub.s32 %s15, 1
        // Predicated region
        $region13: #{tpu_custom_call.1} parent=11 // pred_check
          %p103 = pneg %p62
        $region14: #{tpu_custom_call.1} parent=11 // pred_check_branch
          %105 = sbr.rel (%p103) target = $region16
        $region15: #{tpu_custom_call.1} parent=11 // pred_region
          %s107 = ssub.s32 128, 128
          %108 = vsyncadd [#allocation6], %s107
          %s110 = sshll.u32 [#allocation5], 4
          %s111 = int_to_ptr.vmem [resolvable:$true] %s110
          %113 = dma.hbm_to_vmem [thread:$0]  %s1, 128, %s111, [#allocation6]
        $region16: #{tpu_custom_call.1} parent=11 // pred_fallthru
          _
      $region12: #{tpu_custom_call.1} parent=5 // pred_fallthru
        _
      %p114 = scmp.lt.s32.totalorder %s15, 2
      // Predicated region
      $region17: #{tpu_custom_call.1} parent=5 // pred_check
        %p115 = pneg %p114
      $region18: #{tpu_custom_call.1} parent=5 // pred_check_branch
        %117 = sbr.rel (%p115) target = $region20
      $region19: #{tpu_custom_call.1} parent=5 // pred_region
        // Predicated region
        $region21: #{tpu_custom_call.1} parent=19 // pred_check
          %p118 = pneg %p35
        $region22: #{tpu_custom_call.1} parent=19 // pred_check_branch
          %120 = sbr.rel (%p118) target = $region24
        $region23: #{tpu_custom_call.1} parent=19 // pred_region
          %s121 = sand.u32 %s25, 1
          %s122 = scalar_lea.sflag [#allocation3], %s121
          %s123 = sand.u32 %s25, 1
          %s124 = smul.addr %s123, 24
          %s125 = scalar_lea.vmem [#allocation2], %s124
          %s127 = ssub.s32 384, 384
          %128 = vsyncadd %s122, %s127
          %s129 = smul.addr %s15, 6
          %s130 = smul.addr %s129, 64
          %s131 = scalar_lea.hbm %s0, %s130
          %s132 = sshll.u32 %s125, 4
          %s133 = int_to_ptr.vmem [resolvable:$true] %s132
          %138 = dma.hbm_to_vmem [thread:$0]  %s131, 384, %s133, %s122, 192, 192, 12
        $region24: #{tpu_custom_call.1} parent=19 // pred_fallthru
          _
      $region20: #{tpu_custom_call.1} parent=5 // pred_fallthru
        _
      %p139 = scmp.le.s32.totalorder 1, %s15
      %p140 = scmp.lt.s32.totalorder %s15, 3
      %p141 = pnand %p139, %p140
      %p142 = pneg %p141
      // Predicated region
      $region25: #{tpu_custom_call.1} parent=5 // pred_check
        _
      $region26: #{tpu_custom_call.1} parent=5 // pred_check_branch
        %144 = sbr.rel (%p141) target = $region28
      $region27: #{tpu_custom_call.1} parent=5 // pred_region
        %s145 = ssub.s32 %s15, 1
        %s146 = sand.u32 %s28, 1
        %s147 = scalar_lea.sflag [#allocation3], %s146
        %s148 = sand.u32 %s28, 1
        %s149 = smul.addr %s148, 24
        %s150 = scalar_lea.vmem [#allocation2], %s149
        // Predicated region
        $region29: #{tpu_custom_call.1} parent=27 // pred_check
          %p151 = pneg %p41
        $region30: #{tpu_custom_call.1} parent=27 // pred_check_branch
          %153 = sbr.rel (%p151) target = $region32
        $region31: #{tpu_custom_call.1} parent=27 // pred_region
          %154 = dma.done %s147, 384
        $region32: #{tpu_custom_call.1} parent=27 // pred_fallthru
          _
        // Predicated region
        $region33: #{tpu_custom_call.1} parent=27 // pred_check
          %p155 = pneg %p62
        $region34: #{tpu_custom_call.1} parent=27 // pred_check_branch
          %157 = sbr.rel (%p155) target = $region36
        $region35: #{tpu_custom_call.1} parent=27 // pred_region
          %158 = dma.done [#allocation6], 128
        $region36: #{tpu_custom_call.1} parent=27 // pred_fallthru
          _
        %s159 = sand.u32 %s28, 1
        %s160 = scalar_lea.sflag [#allocation3], %s159
        %s161 = sand.u32 %s28, 1
        %s162 = smul.addr %s161, 24
        %s163 = scalar_lea.vmem [#allocation2], %s162
        %p164 = pneg %p41
        %p165 = pneg %p38
        %p166 = pneg %p62
        %p167 = pneg %p59
        %p168 = pneg %p88
        %p169 = pneg %p85
        %s170 = sand.u32 %s75, 1
        %s171 = scalar_lea.sflag [#allocation4], %s170
        %s172 = sand.u32 %s75, 1
        %s173 = smul.addr %s172, 24
        %s174 = scalar_lea.vmem [#allocation7], %s173
        %v176 = vld [vmem:[%s150] sm:$0xff]
        %v177 = vld [vmem:[%s150 + $0x8] sm:$0xf]
        %v178 = vld [vmem:[%s150 + $0xc] sm:$0xff]
        %v179 = vld [vmem:[%s150 + $0x14] sm:$0xf]
        %v184 = vunpack.c.l.b16 %v176
        %v185 = vunpack.c.h.b16 %v176
        %v186 = vunpack.c.l.b16 %v177
        %v187 = vunpack.c.l.b16 %v178
        %v188 = vunpack.c.h.b16 %v178
        %v189 = vunpack.c.l.b16 %v179
        %v190 = vpack.c.b16 %v187, %v184
        %v191 = vpack.c.b16 %v188, %v185
        %v192 = vpack.c.b16 %v189, %v186
        %196 = vrot.lane.b32.xlu0 %v190, 127
        %v197 = vpop.permute.xlu0 %196
        %198 = vrot.lane.b32.xlu0 %v191, 127
        %v199 = vpop.permute.xlu0 %198
        %200 = vrot.lane.b32.xlu0 %v192, 127
        %v201 = vpop.permute.xlu0 %200
        %vm202 = vcmask 1039360
        %v203 = vsel %vm202, %v197, %v199
        %v204 = vsel %vm202, %v199, %v201
        %208 = vrot.lane.b32.xlu0 %v190, 126
        %v209 = vpop.permute.xlu0 %208
        %210 = vrot.lane.b32.xlu0 %v191, 126
        %v211 = vpop.permute.xlu0 %210
        %212 = vrot.lane.b32.xlu0 %v192, 126
        %v213 = vpop.permute.xlu0 %212
        %vm214 = vcmask 1031168
        %v215 = vsel %vm214, %v209, %v211
        %v216 = vsel %vm214, %v211, %v213
        %220 = vrot.lane.b32.xlu0 %v190, 110
        %v221 = vpop.permute.xlu0 %220
        %222 = vrot.lane.b32.xlu0 %v191, 110
        %v223 = vpop.permute.xlu0 %222
        %224 = vrot.lane.b32.xlu0 %v192, 110
        %v225 = vpop.permute.xlu0 %224
        %vm226 = vcmask 900096
        %v227 = vsel %vm226, %v221, %v223
        %v228 = vsel %vm226, %v223, %v225
        %232 = vrot.lane.b32.xlu0 %v190, 109
        %v233 = vpop.permute.xlu0 %232
        %234 = vrot.lane.b32.xlu0 %v191, 109
        %v235 = vpop.permute.xlu0 %234
        %236 = vrot.lane.b32.xlu0 %v192, 109
        %v237 = vpop.permute.xlu0 %236
        %vm238 = vcmask 891904
        %v239 = vsel %vm238, %v233, %v235
        %v240 = vsel %vm238, %v235, %v237
        %244 = vrot.lane.b32.xlu0 %v190, 108
        %v245 = vpop.permute.xlu0 %244
        %246 = vrot.lane.b32.xlu0 %v191, 108
        %v247 = vpop.permute.xlu0 %246
        %248 = vrot.lane.b32.xlu0 %v192, 108
        %v249 = vpop.permute.xlu0 %248
        %vm250 = vcmask 883712
        %v251 = vsel %vm250, %v245, %v247
        %v252 = vsel %vm250, %v247, %v249
        %256 = vrot.lane.b32.xlu0 %v190, 92
        %v257 = vpop.permute.xlu0 %256
        %258 = vrot.lane.b32.xlu0 %v191, 92
        %v259 = vpop.permute.xlu0 %258
        %260 = vrot.lane.b32.xlu0 %v192, 92
        %v261 = vpop.permute.xlu0 %260
        %vm262 = vcmask 752640
        %v263 = vsel %vm262, %v257, %v259
        %v264 = vsel %vm262, %v259, %v261
        %268 = vrot.lane.b32.xlu0 %v190, 91
        %v269 = vpop.permute.xlu0 %268
        %270 = vrot.lane.b32.xlu0 %v191, 91
        %v271 = vpop.permute.xlu0 %270
        %272 = vrot.lane.b32.xlu0 %v192, 91
        %v273 = vpop.permute.xlu0 %272
        %vm274 = vcmask 744448
        %v275 = vsel %vm274, %v269, %v271
        %v276 = vsel %vm274, %v271, %v273
        %280 = vrot.lane.b32.xlu0 %v190, 90
        %v281 = vpop.permute.xlu0 %280
        %282 = vrot.lane.b32.xlu0 %v191, 90
        %v283 = vpop.permute.xlu0 %282
        %284 = vrot.lane.b32.xlu0 %v192, 90
        %v285 = vpop.permute.xlu0 %284
        %vm286 = vcmask 736256
        %v287 = vsel %vm286, %v281, %v283
        %v288 = vsel %vm286, %v283, %v285
        %v292 = vld [vmem:[#allocation5] sm:$0xff]
        %v294 = vunpack.c.l.b16 %v292
        %v295 = vunpack.c.h.b16 %v292
        %v296 = vpack.c.b16 %v294, %v294
        %v297 = vpack.c.b16 %v295, %v295
        %vm299 = vcmask 130048
        %v301 = vsel %vm299, %v297, 0
        %303 = vmatprep.subr.bf16.mxu0 %v191
        %304 = vmatpush1.bf16.msra.mxu0 %v190
        %305 = vmatprep.subr.bf16.mxu0 %v204
        %306 = vmatpush1.bf16.msra.mxu0 %v203
        %307 = vmatprep.subr.bf16.mxu0 %v216
        %308 = vmatpush1.bf16.msra.mxu0 %v215
        %309 = vmatprep.subr.bf16.mxu0 %v228
        %310 = vmatpush1.bf16.msra.mxu0 %v227
        %311 = vmatprep.subr.bf16.mxu0 %v240
        %312 = vmatpush1.bf16.msra.mxu0 %v239
        %313 = vmatprep.subr.bf16.mxu0 %v252
        %314 = vmatpush1.bf16.msra.mxu0 %v251
        %315 = vmatprep.subr.bf16.mxu0 %v264
        %316 = vmatpush1.bf16.msra.mxu0 %v263
        %317 = vmatprep.subr.bf16.mxu0 %v276
        %318 = vmatpush1.bf16.msra.mxu0 %v275
        %319 = vmatprep.subr.bf16.mxu0 %v288
        %320 = vmatpush1.bf16.msra.mxu0 %v287
        %321 = vmatprep.subr.bf16.mxu0 0
        %322 = vmatpush1.bf16.msra.mxu0 0
        %323 = vmatprep.subr.bf16.mxu0 0
        %324 = vmatpush1.bf16.msra.mxu0 0
        %325 = vmatprep.subr.bf16.mxu0 0
        %326 = vmatpush1.bf16.msra.mxu0 0
        %327 = vmatprep.subr.bf16.mxu0 0
        %328 = vmatpush1.bf16.msra.mxu0 0
        %329 = vmatprep.subr.bf16.mxu0 0
        %330 = vmatpush1.bf16.msra.mxu0 0
        %331 = vmatprep.subr.bf16.mxu0 0
        %332 = vmatpush1.bf16.msra.mxu0 0
        %333 = vmatprep.subr.bf16.mxu0 0
        %334 = vmatpush1.bf16.msra.mxu0 0
        %335 = vmatprep.mubr.bf16.mxu0 %v301
        %336 = vmatmul.mubr.bf16.gmra.mrb[0].mxu0 %v296
        %v337 = vpop.f32.mrb[0].mxu0
        %v338 = vadd.f32 0.0, %v337
        %v339 = vpop.f32.mrb[0].mxu0
        %v340 = vadd.f32 0.0, %v339
        %v341 = vpop.f32.mrb[0].mxu0
        %v342 = vpop.f32.mrb[0].mxu0
        %343 = vdwg.mxu0
        %344 = vmatprep.subr.bf16.mxu0 0
        %345 = vmatpush1.bf16.msra.mxu0 %v192
        %346 = vmatprep.subr.bf16.mxu0 0
        %347 = vmatpush1.bf16.msra.mxu0 %v201
        %348 = vmatprep.subr.bf16.mxu0 0
        %349 = vmatpush1.bf16.msra.mxu0 %v213
        %350 = vmatprep.subr.bf16.mxu0 0
        %351 = vmatpush1.bf16.msra.mxu0 %v225
        %352 = vmatprep.subr.bf16.mxu0 0
        %353 = vmatpush1.bf16.msra.mxu0 %v237
        %354 = vmatprep.subr.bf16.mxu0 0
        %355 = vmatpush1.bf16.msra.mxu0 %v249
        %356 = vmatprep.subr.bf16.mxu0 0
        %357 = vmatpush1.bf16.msra.mxu0 %v261
        %358 = vmatprep.subr.bf16.mxu0 0
        %359 = vmatpush1.bf16.msra.mxu0 %v273
        %360 = vmatprep.subr.bf16.mxu0 0
        %361 = vmatpush1.bf16.msra.mxu0 %v285
        %362 = vmatprep.subr.bf16.mxu0 0
        %363 = vmatpush1.bf16.msra.mxu0 0
        %364 = vmatprep.subr.bf16.mxu0 0
        %365 = vmatpush1.bf16.msra.mxu0 0
        %366 = vmatprep.subr.bf16.mxu0 0
        %367 = vmatpush1.bf16.msra.mxu0 0
        %368 = vmatprep.subr.bf16.mxu0 0
        %369 = vmatpush1.bf16.msra.mxu0 0
        %370 = vmatprep.subr.bf16.mxu0 0
        %371 = vmatpush1.bf16.msra.mxu0 0
        %372 = vmatprep.subr.bf16.mxu0 0
        %373 = vmatpush1.bf16.msra.mxu0 0
        %374 = vmatprep.subr.bf16.mxu0 0
        %375 = vmatpush1.bf16.msra.mxu0 0
        %376 = vmatprep.mubr.bf16.mxu0 %v301
        %377 = vmatmul.mubr.bf16.gmra.mrb[0].mxu0 %v296
        %v378 = vpop.f32.mrb[0].mxu0
        %v379 = vadd.f32 0.0, %v378
        %v380 = vpop.f32.mrb[0].mxu0
        %v381 = vpop.f32.mrb[0].mxu0
        %v382 = vpop.f32.mrb[0].mxu0
        %383 = vdwg.mxu0
        %v384 = vmax.f32 %v338, 0.0
        %v385 = vmax.f32 %v340, 0.0
        %v386 = vmax.f32 %v379, 0.0
        %387 = vst [vmem:[%s174] sm:$0xff] %v384
        %388 = vst [vmem:[%s174 + $0x8] sm:$0xff] %v385
        %vm389 = vcmask 261120
        %390 = vst.msk [vmem:[%s174 + $0x10] sm:$0xff] %vm389, %v386
        %s391 = sand.u32 %s75, 1
        %s392 = scalar_lea.sflag [#allocation4], %s391
        %s393 = sand.u32 %s75, 1
        %s394 = smul.addr %s393, 24
        %s395 = scalar_lea.vmem [#allocation7], %s394
        // Predicated region
        $region37: #{tpu_custom_call.1} parent=27 // pred_check
          %p396 = pneg %p85
        $region38: #{tpu_custom_call.1} parent=27 // pred_check_branch
          %398 = sbr.rel (%p396) target = $region40
        $region39: #{tpu_custom_call.1} parent=27 // pred_region
          %s400 = ssub.s32 384, 384
          %401 = vsyncadd %s392, %s400
          %s402 = smul.addr %s20, 3
          %s403 = smul.addr %s402, 128
          %s404 = scalar_lea.hbm %s2, %s403
          %s406 = sshll.u32 %s395, 4
          %s407 = int_to_ptr.vmem [resolvable:$true] %s406
          %409 = dma.vmem_to_hbm [thread:$0]  %s407, 384, %s404, %s392
        $region40: #{tpu_custom_call.1} parent=27 // pred_fallthru
          _
      $region28: #{tpu_custom_call.1} parent=5 // pred_fallthru
        _
      %p410 = scmp.le.s32.totalorder 2, %s15
      // Predicated region
      $region41: #{tpu_custom_call.1} parent=5 // pred_check
        %p411 = pneg %p410
      $region42: #{tpu_custom_call.1} parent=5 // pred_check_branch
        %413 = sbr.rel (%p411) target = $region44
      $region43: #{tpu_custom_call.1} parent=5 // pred_region
        %s414 = ssub.s32 %s15, 2
        // Predicated region
        $region45: #{tpu_custom_call.1} parent=43 // pred_check
          %p415 = pneg %p91
        $region46: #{tpu_custom_call.1} parent=43 // pred_check_branch
          %417 = sbr.rel (%p415) target = $region48
        $region47: #{tpu_custom_call.1} parent=43 // pred_region
          %s418 = sand.u32 %s76, 1
          %s419 = scalar_lea.sflag [#allocation4], %s418
          %s420 = sand.u32 %s76, 1
          %s421 = smul.addr %s420, 24
          %s422 = scalar_lea.vmem [#allocation7], %s421
          %423 = dma.done %s419, 384
        $region48: #{tpu_custom_call.1} parent=43 // pred_fallthru
          _
      $region44: #{tpu_custom_call.1} parent=5 // pred_fallthru
        _
    $region6: #{tpu_custom_call.1} parent=1 // loop_footer
      %s19 = sadd.s32 1, %s15
    $region7: #{tpu_custom_call.1} parent=1 // loop_footer_branch
      %14 = sbr.rel target = $region3
    $region8: #{tpu_custom_call.1} parent=1 // loop_exit
      _
    %424 = vsyncpa [#allocation3], 1
    %s425 = scalar_lea.sflag [#allocation3], 1
    %426 = vsyncpa %s425, 1
    %427 = vsyncpa [#allocation6], 1
    %428 = vsyncpa [#allocation4], 1
    %s429 = scalar_lea.sflag [#allocation4], 1
    %430 = vsyncpa %s429, 1

</llo_original>
